<compile_context>
chip_gen: v5e
topology: v5e:2x2
jax: 0.10.0
libtpu: 0.0.40
codegen_flags: <defaults>
</compile_context>

<pallas_src>
import functools

import jax
import jax.numpy as jnp
from jax.experimental import pallas as pl
from jax.experimental.pallas import tpu as pltpu

IN_DIM = 16
HID_DIM = 100
OUT_DIM = 26

HID_PAD = 128   # 100 -> 128 (lane aligned)
OUT_PAD = 128   # 26  -> 128 (lane-dense stores)

# Large negative bias for the padded logit lanes: exp(NEG_MASK - max) underflows
# to exactly 0, so the padded lanes never touch the softmax denominator.
NEG_MASK = -1e30


def _round_up(n, m):
    return ((n + m - 1) // m) * m


def mlp_softmax_kernel(x_ref, w1_ref, b1_ref, w2_ref, b2_ref, w3_ref, b3_ref, o_ref):
    # Cast x to the MXU-input dtype (bf16 by default) on the VPU; no-op for f32.
    x = x_ref[...].astype(w1_ref.dtype)
    # Layer 1: Linear(16 -> 128 padded) + ReLU   (f32 accumulation on MXU)
    h1 = jnp.dot(x, w1_ref[...], preferred_element_type=jnp.float32)
    h1 = jnp.maximum(h1 + b1_ref[...], 0.0)
    # Layer 2: Linear(128 -> 128 padded) + ReLU
    h2 = jnp.dot(h1.astype(w2_ref.dtype), w2_ref[...],
                 preferred_element_type=jnp.float32)
    h2 = jnp.maximum(h2 + b2_ref[...], 0.0)
    # Layer 3: Linear(128 -> 128 padded logits). Padded lanes get bias NEG_MASK.
    logits = jnp.dot(h2.astype(w3_ref.dtype), w3_ref[...],
                     preferred_element_type=jnp.float32)
    logits = logits + b3_ref[...]
    # Numerically-stable softmax over the feature axis. Padded lanes are at
    # ~-1e30, so exp(..) == 0 and they do not affect max / sum.
    m = jnp.max(logits, axis=1, keepdims=True)
    e = jnp.exp(logits - m)
    denom = jnp.sum(e, axis=1, keepdims=True)
    # approx reciprocal runs on the (otherwise idle) EUP slot; one Newton step
    # restores full f32 accuracy so sum(probs) == 1 to ~1e-7.
    r = pl.reciprocal(denom, approx=True)
    r = r * (2.0 - denom * r)
    o_ref[...] = (e * r).astype(o_ref.dtype)


def pad_params(params):
    """Zero-pad hidden dim 100->128 and output 26->128 (padded logit bias = NEG_MASK)."""
    w1, b1, w2, b2, w3, b3 = params
    w1p = jnp.zeros((IN_DIM, HID_PAD), jnp.float32).at[:, :HID_DIM].set(w1)
    b1p = jnp.zeros((1, HID_PAD), jnp.float32).at[:, :HID_DIM].set(b1)
    w2p = jnp.zeros((HID_PAD, HID_PAD), jnp.float32).at[:HID_DIM, :HID_DIM].set(w2)
    b2p = jnp.zeros((1, HID_PAD), jnp.float32).at[:, :HID_DIM].set(b2)
    w3p = jnp.zeros((HID_PAD, OUT_PAD), jnp.float32).at[:HID_DIM, :OUT_DIM].set(w3)
    b3p = jnp.full((1, OUT_PAD), NEG_MASK, jnp.float32).at[:, :OUT_DIM].set(b3)
    return w1p, b1p, w2p, b2p, w3p, b3p


@functools.partial(
    jax.jit, static_argnames=("compute_dtype", "out_dtype", "tm", "return_padded"))
def mlp_softmax(x, params, *, compute_dtype=jnp.bfloat16, out_dtype=jnp.float32,
                tm=2048, return_padded=False):
    """Fused MLP (Linear->ReLU->Linear->ReLU->Linear->Softmax) Pallas kernel."""
    w1, b1, w2, b2, w3, b3 = pad_params(params)
    batch = x.shape[0]

    # Weights pre-cast once to the MXU input dtype (~60 KB, VMEM-resident across
    # the whole grid). Biases stay f32.
    w1 = w1.astype(compute_dtype)
    w2 = w2.astype(compute_dtype)
    w3 = w3.astype(compute_dtype)

    # --- Row-tile selection ---
    # Multiple of 8 sublanes, no larger than the (8-rounded) batch, VMEM-capped
    # at 4096 rows (~2 KB/row of VMEM for out double-buffer + h1/h2 slabs).
    tm = max(8, min(tm, _round_up(batch, 8), 4096))
    # Megacore: for large batches make sure the parallel axis has >= 2 steps so
    # both TensorCores on v7x get work.
    if batch >= 1024:
        tm = min(tm, _round_up(-(-batch // 2), 8))

    # Ragged last block is handled by Pallas: garbage rows are row-independent
    # through all three matmuls + softmax and are masked on store.
    grid = (pl.cdiv(batch, tm),)

    def const_spec(arr):
        # Weights / biases: same (whole-array) block every grid step -> stay VMEM resident.
        return pl.BlockSpec(arr.shape, lambda i: (0, 0))

    out_padded = pl.pallas_call(
        mlp_softmax_kernel,
        out_shape=jax.ShapeDtypeStruct((batch, OUT_PAD), out_dtype),
        grid=grid,
        in_specs=[
            pl.BlockSpec((tm, IN_DIM), lambda i: (i, 0)),   # x tile, walks the batch
            const_spec(w1), const_spec(b1),
            const_spec(w2), const_spec(b2),
            const_spec(w3), const_spec(b3),
        ],
        # Lane-dense 128-wide stores (unmasked vst). NOTE: out pipeline depth
        # left at the default 2; bump via pipeline_mode=pl.Buffered(3) only if a
        # profile shows exposed output DMA after enlarging tm.
        out_specs=pl.BlockSpec((tm, OUT_PAD), lambda i: (i, 0)),
        compiler_params=pltpu.CompilerParams(
            dimension_semantics=("parallel",),      # megacore sharding on v7x
            vmem_limit_bytes=32 * 1024 * 1024,      # headroom for tm up to 4096 (v5e default is 16 MiB)
        ),
    )(x, w1, b1, w2, b2, w3, b3)

    if return_padded:
        # Consumers that only argmax/sample can index lanes [:26] lazily and skip
        # the extra HBM pass of the slice copy below.
        return out_padded
    return out_padded[:, :OUT_DIM]


def init_params(key):
    # Deterministic synthetic init (PyTorch-style uniform bounds 1/sqrt(fan_in)).
    k1, k2, k3, k4, k5, k6 = jax.random.split(key, 6)

    def lin(kw, kb, fan_in, fan_out):
        bound = 1.0 / jnp.sqrt(fan_in)
        w = jax.random.uniform(kw, (fan_in, fan_out), jnp.float32, -bound, bound)
        b = jax.random.uniform(kb, (1, fan_out), jnp.float32, -bound, bound)
        return w, b

    w1, b1 = lin(k1, k2, IN_DIM, HID_DIM)
    w2, b2 = lin(k3, k4, HID_DIM, HID_DIM)
    w3, b3 = lin(k5, k6, HID_DIM, OUT_DIM)
    return (w1, b1, w2, b2, w3, b3)


def reference(x, params):
    w1, b1, w2, b2, w3, b3 = params
    h1 = jnp.maximum(x @ w1 + b1, 0.0)
    h2 = jnp.maximum(h1 @ w2 + b2, 0.0)
    logits = h2 @ w3 + b3
    return jax.nn.softmax(logits, axis=1)


if __name__ == "__main__":
    key = jax.random.PRNGKey(0)
    kx, kp, kx2 = jax.random.split(key, 3)
    params = init_params(kp)

    # --- Small batch, f32 compute path, tight tolerance ---
    batch = 8
    x = jax.random.normal(kx, (batch, IN_DIM), jnp.float32)
    out = jax.block_until_ready(mlp_softmax(x, params, compute_dtype=jnp.float32))
    ref = reference(x, params)
    assert out.shape == (batch, OUT_DIM)
    assert jnp.allclose(out, ref, atol=1e-5, rtol=1e-5)
    assert jnp.allclose(jnp.sum(out, axis=1), jnp.ones((batch,)), atol=1e-5)

    # --- Larger batch exercising the grid with a ragged last tile (300 rows, tm=128 -> 3 steps) ---
    batch2 = 300
    x2 = jax.random.normal(kx2, (batch2, IN_DIM), jnp.float32)
    out2 = jax.block_until_ready(
        mlp_softmax(x2, params, compute_dtype=jnp.float32, tm=128))
    ref2 = reference(x2, params)
    assert out2.shape == (batch2, OUT_DIM)
    assert jnp.allclose(out2, ref2, atol=1e-5, rtol=1e-5)

    # --- Default path: bf16 MXU inputs (f32 accumulate), looser tolerance ---
    out_bf16 = jax.block_until_ready(mlp_softmax(x2, params, tm=128))
    assert jnp.allclose(out_bf16, ref2, atol=2e-2, rtol=2e-2)
    assert jnp.allclose(jnp.sum(out_bf16, axis=1), jnp.ones((batch2,)), atol=1e-3)

    # --- Padded-slab return path (consumer skips the slice copy); padded lanes are exactly 0 ---
    out_pad = jax.block_until_ready(
        mlp_softmax(x2, params, compute_dtype=jnp.float32, tm=128, return_padded=True))
    assert out_pad.shape == (batch2, OUT_PAD)
    assert jnp.allclose(out_pad[:, :OUT_DIM], ref2, atol=1e-5, rtol=1e-5)
    assert jnp.all(out_pad[:, OUT_DIM:] == 0.0)

    print("KERNEL_OK")
</pallas_src>

<mosaic_0001>
module attributes {stable_mosaic.version = 11 : i64} {
  func.func @mlp_softmax_kernel(%arg0: i32, %arg1: memref<8x16xf32, #tpu.memory_space<vmem>>, %arg2: memref<16x128xf32, #tpu.memory_space<vmem>>, %arg3: memref<1x128xf32, #tpu.memory_space<vmem>>, %arg4: memref<128x128xf32, #tpu.memory_space<vmem>>, %arg5: memref<1x128xf32, #tpu.memory_space<vmem>>, %arg6: memref<128x128xf32, #tpu.memory_space<vmem>>, %arg7: memref<1x128xf32, #tpu.memory_space<vmem>>, %arg8: memref<8x128xf32, #tpu.memory_space<vmem>>) attributes {dimension_semantics = [#tpu.dimension_semantics<parallel>], iteration_bounds = array<i64: 1>, scalar_prefetch = 0 : i64, scratch_operands = 0 : i64, tpu.core_type = #tpu.core_type<tc>, window_params = [{transform_indices = @transform_0, window_bounds = array<i64: 8, 16>}, {pipeline_mode = #tpu.pipeline_mode<synchronous>, transform_indices = @transform_1, window_bounds = array<i64: 16, 128>}, {pipeline_mode = #tpu.pipeline_mode<synchronous>, transform_indices = @transform_2, window_bounds = array<i64: 1, 128>}, {pipeline_mode = #tpu.pipeline_mode<synchronous>, transform_indices = @transform_3, window_bounds = array<i64: 128, 128>}, {pipeline_mode = #tpu.pipeline_mode<synchronous>, transform_indices = @transform_4, window_bounds = array<i64: 1, 128>}, {pipeline_mode = #tpu.pipeline_mode<synchronous>, transform_indices = @transform_5, window_bounds = array<i64: 128, 128>}, {pipeline_mode = #tpu.pipeline_mode<synchronous>, transform_indices = @transform_6, window_bounds = array<i64: 1, 128>}, {transform_indices = @transform_7, window_bounds = array<i64: 8, 128>}]} {
    %c0 = arith.constant 0 : index
    %c0_0 = arith.constant 0 : index
    %0 = vector.load %arg1[%c0, %c0_0] : memref<8x16xf32, #tpu.memory_space<vmem>>, vector<8x16xf32>
    %c0_1 = arith.constant 0 : index
    %c0_2 = arith.constant 0 : index
    %1 = vector.load %arg2[%c0_1, %c0_2] : memref<16x128xf32, #tpu.memory_space<vmem>>, vector<16x128xf32>
    %cst = arith.constant dense<0.000000e+00> : vector<8x128xf32>
    %2 = tpu.matmul %0, %1, %cst {dimension_numbers = #tpu.dot_dimension_numbers<[1], [0], [0], [1], [0, 0, 1, 1], [], []>} : vector<8x16xf32>, vector<16x128xf32>, vector<8x128xf32> -> vector<8x128xf32>
    %c0_3 = arith.constant 0 : index
    %c0_4 = arith.constant 0 : index
    %3 = vector.load %arg3[%c0_3, %c0_4] : memref<1x128xf32, #tpu.memory_space<vmem>>, vector<1x128xf32>
    %4 = vector.broadcast %3 : vector<1x128xf32> to vector<8x128xf32>
    %5 = arith.addf %2, %4 : vector<8x128xf32>
    %cst_5 = arith.constant 0.000000e+00 : f32
    %6 = vector.broadcast %cst_5 : f32 to vector<8x128xf32>
    %7 = arith.maximumf %5, %6 : vector<8x128xf32>
    %c0_6 = arith.constant 0 : index
    %c0_7 = arith.constant 0 : index
    %8 = vector.load %arg4[%c0_6, %c0_7] : memref<128x128xf32, #tpu.memory_space<vmem>>, vector<128x128xf32>
    %cst_8 = arith.constant dense<0.000000e+00> : vector<8x128xf32>
    %9 = tpu.matmul %7, %8, %cst_8 {dimension_numbers = #tpu.dot_dimension_numbers<[1], [0], [0], [1], [0, 0, 1, 1], [], []>} : vector<8x128xf32>, vector<128x128xf32>, vector<8x128xf32> -> vector<8x128xf32>
    %c0_9 = arith.constant 0 : index
    %c0_10 = arith.constant 0 : index
    %10 = vector.load %arg5[%c0_9, %c0_10] : memref<1x128xf32, #tpu.memory_space<vmem>>, vector<1x128xf32>
    %11 = vector.broadcast %10 : vector<1x128xf32> to vector<8x128xf32>
    %12 = arith.addf %9, %11 : vector<8x128xf32>
    %cst_11 = arith.constant 0.000000e+00 : f32
    %13 = vector.broadcast %cst_11 : f32 to vector<8x128xf32>
    %14 = arith.maximumf %12, %13 : vector<8x128xf32>
    %c0_12 = arith.constant 0 : index
    %c0_13 = arith.constant 0 : index
    %15 = vector.load %arg6[%c0_12, %c0_13] : memref<128x128xf32, #tpu.memory_space<vmem>>, vector<128x128xf32>
    %cst_14 = arith.constant dense<0.000000e+00> : vector<8x128xf32>
    %16 = tpu.matmul %14, %15, %cst_14 {dimension_numbers = #tpu.dot_dimension_numbers<[1], [0], [0], [1], [0, 0, 1, 1], [], []>} : vector<8x128xf32>, vector<128x128xf32>, vector<8x128xf32> -> vector<8x128xf32>
    %c0_15 = arith.constant 0 : index
    %c0_16 = arith.constant 0 : index
    %17 = vector.load %arg7[%c0_15, %c0_16] : memref<1x128xf32, #tpu.memory_space<vmem>>, vector<1x128xf32>
    %18 = vector.broadcast %17 : vector<1x128xf32> to vector<8x128xf32>
    %19 = arith.addf %16, %18 : vector<8x128xf32>
    %cst_17 = arith.constant dense<0xFF800000> : vector<8xf32>
    %20 = vector.multi_reduction <maximumf>, %19, %cst_17 [1] : vector<8x128xf32> to vector<8xf32>
    %21 = vector.shape_cast %20 : vector<8xf32> to vector<8x1xf32>
    %22 = vector.broadcast %21 : vector<8x1xf32> to vector<8x128xf32>
    %23 = arith.subf %19, %22 : vector<8x128xf32>
    %24 = math.exp %23 : vector<8x128xf32>
    %cst_18 = arith.constant dense<0.000000e+00> : vector<8xf32>
    %25 = vector.multi_reduction <add>, %24, %cst_18 [1] : vector<8x128xf32> to vector<8xf32>
    %26 = vector.shape_cast %25 : vector<8xf32> to vector<8x1xf32>
    %27 = tpu.reciprocal %26 {approx = true} : vector<8x1xf32> -> vector<8x1xf32>
    %28 = arith.mulf %26, %27 : vector<8x1xf32>
    %cst_19 = arith.constant 2.000000e+00 : f32
    %29 = vector.broadcast %cst_19 : f32 to vector<8x1xf32>
    %30 = arith.subf %29, %28 : vector<8x1xf32>
    %31 = arith.mulf %27, %30 : vector<8x1xf32>
    %32 = vector.broadcast %31 : vector<8x1xf32> to vector<8x128xf32>
    %33 = arith.mulf %24, %32 : vector<8x128xf32>
    %c0_20 = arith.constant 0 : index
    %c0_21 = arith.constant 0 : index
    %34 = vector.load %arg8[%c0_20, %c0_21] : memref<8x128xf32, #tpu.memory_space<vmem>>, vector<8x128xf32>
    tpu.vector_store %arg8[%c0_20, %c0_21], %33 {strides = array<i32>} : memref<8x128xf32, #tpu.memory_space<vmem>>, vector<8x128xf32>,
    return
  }
  func.func @transform_0(%arg0: i32) -> (i32, i32) {
    %c0_i32 = arith.constant 0 : i32
    %c0_i32_0 = arith.constant 0 : i32
    return %arg0, %c0_i32 : i32, i32
  }
  func.func @transform_1(%arg0: i32) -> (i32, i32) {
    %c0_i32 = arith.constant 0 : i32
    %c0_i32_0 = arith.constant 0 : i32
    %c0_i32_1 = arith.constant 0 : i32
    return %c0_i32, %c0_i32_0 : i32, i32
  }
  func.func @transform_2(%arg0: i32) -> (i32, i32) {
    %c0_i32 = arith.constant 0 : i32
    %c0_i32_0 = arith.constant 0 : i32
    %c0_i32_1 = arith.constant 0 : i32
    return %c0_i32, %c0_i32_0 : i32, i32
  }
  func.func @transform_3(%arg0: i32) -> (i32, i32) {
    %c0_i32 = arith.constant 0 : i32
    %c0_i32_0 = arith.constant 0 : i32
    %c0_i32_1 = arith.constant 0 : i32
    return %c0_i32, %c0_i32_0 : i32, i32
  }
  func.func @transform_4(%arg0: i32) -> (i32, i32) {
    %c0_i32 = arith.constant 0 : i32
    %c0_i32_0 = arith.constant 0 : i32
    %c0_i32_1 = arith.constant 0 : i32
    return %c0_i32, %c0_i32_0 : i32, i32
  }
  func.func @transform_5(%arg0: i32) -> (i32, i32) {
    %c0_i32 = arith.constant 0 : i32
    %c0_i32_0 = arith.constant 0 : i32
    %c0_i32_1 = arith.constant 0 : i32
    return %c0_i32, %c0_i32_0 : i32, i32
  }
  func.func @transform_6(%arg0: i32) -> (i32, i32) {
    %c0_i32 = arith.constant 0 : i32
    %c0_i32_0 = arith.constant 0 : i32
    %c0_i32_1 = arith.constant 0 : i32
    return %c0_i32, %c0_i32_0 : i32, i32
  }
  func.func @transform_7(%arg0: i32) -> (i32, i32) {
    %c0_i32 = arith.constant 0 : i32
    %c0_i32_0 = arith.constant 0 : i32
    return %arg0, %c0_i32 : i32, i32
  }
}

</mosaic_0001>

<llo_original>
// kernel: mlp_softmax.1
$region0: #{mlp_softmax.1}
  #allocation0 [shape = 'u32[]', space=smem, size = 0x4, offset = 0x4, fixed_abs, tag = 'smem constant byte address 0x4 - core index']
  #allocation1 [shape = 'u32[72,128]{1,0:T(1,128)}', space=vmem, size = 0x9000, scoped, tag = 'internal scratch']
  %s0 = inlined_call_operand.vmem [shape: f32[8,16], index: 0, kind: input, shape index: {}]
  %s1 = inlined_call_operand.vmem [shape: f32[16,128], index: 1, kind: input, shape index: {}]
  %s2 = inlined_call_operand.vmem [shape: f32[1,128], index: 2, kind: input, shape index: {}]
  %s3 = inlined_call_operand.vmem [shape: f32[128,128], index: 3, kind: input, shape index: {}]
  %s4 = inlined_call_operand.vmem [shape: f32[1,128], index: 4, kind: input, shape index: {}]
  %s5 = inlined_call_operand.vmem [shape: f32[128,128], index: 5, kind: input, shape index: {}]
  %s6 = inlined_call_operand.vmem [shape: f32[1,128], index: 6, kind: input, shape index: {}]
  %s7 = inlined_call_operand.hbm [shape: f32[8,128], index: 7, kind: output, shape index: {}]
  %s8 = sld [smem:[#allocation0]]
  $region38: #{mlp_softmax.1} parent=0
    _
  %s10 = ssub.s32 1, %s8
  %s11 = scalar_select 0, %s10, %s8
  $region1: #{mlp_softmax.1} parent=0
    #allocation2 [shape = 'u8[4096]{0}', space=vmem, size = 0x1000, scoped, tag = 'output window, operand 0, single buffered']
    #allocation3 [shape = 's32[1]{0}', space=sflag, size = 0x4, scoped, tag = 'scoped memory for mlp_softmax.1']
    %12 = vsyncpa [#allocation3], 0
    // Predicated region
    $region2: #{mlp_softmax.1} parent=1 // pred_check
      _
    $region3: #{mlp_softmax.1} parent=1 // pred_check_branch
      %14 = sbr.rel (0) target = $region5
    $region4: #{mlp_softmax.1} parent=1 // pred_region
      _
    $region5: #{mlp_softmax.1} parent=1 // pred_fallthru
      _
    // Predicated region
    $region6: #{mlp_softmax.1} parent=1 // pred_check
      _
    $region7: #{mlp_softmax.1} parent=1 // pred_check_branch
      %16 = sbr.rel (0) target = $region9
    $region8: #{mlp_softmax.1} parent=1 // pred_region
      _
    $region9: #{mlp_softmax.1} parent=1 // pred_fallthru
      _
    // Predicated region
    $region10: #{mlp_softmax.1} parent=1 // pred_check
      _
    $region11: #{mlp_softmax.1} parent=1 // pred_check_branch
      %18 = sbr.rel (0) target = $region13
    $region12: #{mlp_softmax.1} parent=1 // pred_region
      _
    $region13: #{mlp_softmax.1} parent=1 // pred_fallthru
      _
    // Predicated region
    $region14: #{mlp_softmax.1} parent=1 // pred_check
      _
    $region15: #{mlp_softmax.1} parent=1 // pred_check_branch
      %20 = sbr.rel (0) target = $region17
    $region16: #{mlp_softmax.1} parent=1 // pred_region
      _
    $region17: #{mlp_softmax.1} parent=1 // pred_fallthru
      _
    // Predicated region
    $region18: #{mlp_softmax.1} parent=1 // pred_check
      _
    $region19: #{mlp_softmax.1} parent=1 // pred_check_branch
      %22 = sbr.rel (0) target = $region21
    $region20: #{mlp_softmax.1} parent=1 // pred_region
      _
    $region21: #{mlp_softmax.1} parent=1 // pred_fallthru
      _
    // Predicated region
    $region22: #{mlp_softmax.1} parent=1 // pred_check
      _
    $region23: #{mlp_softmax.1} parent=1 // pred_check_branch
      %24 = sbr.rel (0) target = $region25
    $region24: #{mlp_softmax.1} parent=1 // pred_region
      _
    $region25: #{mlp_softmax.1} parent=1 // pred_fallthru
      _
    // Predicated region
    $region26: #{mlp_softmax.1} parent=1 // pred_check
      _
    $region27: #{mlp_softmax.1} parent=1 // pred_check_branch
      %26 = sbr.rel (0) target = $region29
    $region28: #{mlp_softmax.1} parent=1 // pred_region
      _
    $region29: #{mlp_softmax.1} parent=1 // pred_fallthru
      _
    %v27 = vld [vmem:[%s0] sm:$0xff]
    %v28 = vld [vmem:[%s1] sm:$0xff]
    %v29 = vld [vmem:[%s1 + $0x8] sm:$0xff]
    %v30 = vld [vmem:[%s2] sm:$0x1]
    %v32 = vperm.slane %v30, 0
    %vm34 = vcmask 130048
    %v36 = vsel %vm34, %v27, 0
    %38 = vmatpush.msra.mxu0 0.0
    %39 = vmatpush.msra.mxu0 0.0
    %40 = vmatpush.msra.mxu0 0.0
    %41 = vmatpush.msra.mxu0 0.0
    %42 = vmatpush.msra.mxu0 0.0
    %43 = vmatpush.msra.mxu0 0.0
    %44 = vmatpush.msra.mxu0 0.0
    %45 = vmatpush.msra.mxu0 0.0
    %46 = vmatpush.msra.mxu0 0.0
    %47 = vmatpush.msra.mxu0 0.0
    %48 = vmatpush.msra.mxu0 0.0
    %49 = vmatpush.msra.mxu0 0.0
    %50 = vmatpush.msra.mxu0 0.0
    %51 = vmatpush.msra.mxu0 0.0
    %52 = vmatpush.msra.mxu0 %v29
    %53 = vmatpush.msra.mxu0 %v28
    %54 = vmatmul.f32.gmra.mxu0 %v36
    %v55 = vpop.f32.mrf.mxu0
    %v56 = vadd.f32 %v32, %v55
    %57 = vdwg.mxu0
    %v58 = vmax.f32 %v56, 0.0
    %v59 = vld [vmem:[%s3] sm:$0xff]
    %v60 = vld [vmem:[%s3 + $0x8] sm:$0xff]
    %v61 = vld [vmem:[%s3 + $0x10] sm:$0xff]
    %v62 = vld [vmem:[%s3 + $0x18] sm:$0xff]
    %v63 = vld [vmem:[%s3 + $0x20] sm:$0xff]
    %v64 = vld [vmem:[%s3 + $0x28] sm:$0xff]
    %v65 = vld [vmem:[%s3 + $0x30] sm:$0xff]
    %v66 = vld [vmem:[%s3 + $0x38] sm:$0xff]
    %v67 = vld [vmem:[%s3 + $0x40] sm:$0xff]
    %v68 = vld [vmem:[%s3 + $0x48] sm:$0xff]
    %v69 = vld [vmem:[%s3 + $0x50] sm:$0xff]
    %v70 = vld [vmem:[%s3 + $0x58] sm:$0xff]
    %v71 = vld [vmem:[%s3 + $0x60] sm:$0xff]
    %v72 = vld [vmem:[%s3 + $0x68] sm:$0xff]
    %v73 = vld [vmem:[%s3 + $0x70] sm:$0xff]
    %v74 = vld [vmem:[%s3 + $0x78] sm:$0xff]
    %v75 = vld [vmem:[%s4] sm:$0x1]
    %v77 = vperm.slane %v75, 0
    %79 = vmatpush.msra.mxu0 %v74
    %80 = vmatpush.msra.mxu0 %v73
    %81 = vmatpush.msra.mxu0 %v72
    %82 = vmatpush.msra.mxu0 %v71
    %83 = vmatpush.msra.mxu0 %v70
    %84 = vmatpush.msra.mxu0 %v69
    %85 = vmatpush.msra.mxu0 %v68
    %86 = vmatpush.msra.mxu0 %v67
    %87 = vmatpush.msra.mxu0 %v66
    %88 = vmatpush.msra.mxu0 %v65
    %89 = vmatpush.msra.mxu0 %v64
    %90 = vmatpush.msra.mxu0 %v63
    %91 = vmatpush.msra.mxu0 %v62
    %92 = vmatpush.msra.mxu0 %v61
    %93 = vmatpush.msra.mxu0 %v60
    %94 = vmatpush.msra.mxu0 %v59
    %95 = vmatmul.f32.gmra.mxu0 %v58
    %v96 = vpop.f32.mrf.mxu0
    %v97 = vadd.f32 %v77, %v96
    %98 = vdwg.mxu0
    %v99 = vmax.f32 %v97, 0.0
    %v100 = vld [vmem:[%s5] sm:$0xff]
    %v101 = vld [vmem:[%s5 + $0x8] sm:$0xff]
    %v102 = vld [vmem:[%s5 + $0x10] sm:$0xff]
    %v103 = vld [vmem:[%s5 + $0x18] sm:$0xff]
    %v104 = vld [vmem:[%s5 + $0x20] sm:$0xff]
    %v105 = vld [vmem:[%s5 + $0x28] sm:$0xff]
    %v106 = vld [vmem:[%s5 + $0x30] sm:$0xff]
    %v107 = vld [vmem:[%s5 + $0x38] sm:$0xff]
    %v108 = vld [vmem:[%s5 + $0x40] sm:$0xff]
    %v109 = vld [vmem:[%s5 + $0x48] sm:$0xff]
    %v110 = vld [vmem:[%s5 + $0x50] sm:$0xff]
    %v111 = vld [vmem:[%s5 + $0x58] sm:$0xff]
    %v112 = vld [vmem:[%s5 + $0x60] sm:$0xff]
    %v113 = vld [vmem:[%s5 + $0x68] sm:$0xff]
    %v114 = vld [vmem:[%s5 + $0x70] sm:$0xff]
    %v115 = vld [vmem:[%s5 + $0x78] sm:$0xff]
    %v116 = vld [vmem:[%s6] sm:$0x1]
    %v118 = vperm.slane %v116, 0
    %120 = vmatpush.msra.mxu0 %v115
    %121 = vmatpush.msra.mxu0 %v114
    %122 = vmatpush.msra.mxu0 %v113
    %123 = vmatpush.msra.mxu0 %v112
    %124 = vmatpush.msra.mxu0 %v111
    %125 = vmatpush.msra.mxu0 %v110
    %126 = vmatpush.msra.mxu0 %v109
    %127 = vmatpush.msra.mxu0 %v108
    %128 = vmatpush.msra.mxu0 %v107
    %129 = vmatpush.msra.mxu0 %v106
    %130 = vmatpush.msra.mxu0 %v105
    %131 = vmatpush.msra.mxu0 %v104
    %132 = vmatpush.msra.mxu0 %v103
    %133 = vmatpush.msra.mxu0 %v102
    %134 = vmatpush.msra.mxu0 %v101
    %135 = vmatpush.msra.mxu0 %v100
    %136 = vmatmul.f32.gmra.mxu0 %v99
    %v137 = vpop.f32.mrf.mxu0
    %v138 = vadd.f32 %v118, %v137
    %139 = vdwg.mxu0
    %140 = vmax.xlane.f32.xlu0 %v138
    %v141 = vpop.xlane.xlu0 %140
    %v142 = vsub.f32 %v138, %v141
    %v143 = vmul.f32 %v142, 1.442695
    %v144 = vpow.pop %v143
    %145 = vadd.xlane.f32.xlu0 %v144
    %v146 = vpop.xlane.xlu0 %145
    %v147 = vrcp.pop %v146
    %v148 = vmul.f32 %v146, %v147
    %v149 = vsub.f32 2.0, %v148
    %v150 = vmul.f32 %v147, %v149
    %v151 = vmul.f32 %v144, %v150
    %152 = vst [vmem:[#allocation2] sm:$0xff] %v151
    // Predicated region
    $region30: #{mlp_softmax.1} parent=1 // pred_check
      _
    $region31: #{mlp_softmax.1} parent=1 // pred_check_branch
      %154 = sbr.rel (0) target = $region33
    $region32: #{mlp_softmax.1} parent=1 // pred_region
      %156 = vsyncadd [#allocation3], 0
      %s158 = sshll.u32 [#allocation2], 4
      %s159 = int_to_ptr.vmem [resolvable:$true] %s158
      %s160 = sshll.u32 %s7, 4
      %s161 = int_to_ptr.hbm [resolvable:$true] %s160
      %163 = dma.vmem_to_hbm [thread:$0]  %s159, 128, %s161, [#allocation3]
    $region33: #{mlp_softmax.1} parent=1 // pred_fallthru
      _
    // Predicated region
    $region34: #{mlp_softmax.1} parent=1 // pred_check
      _
    $region35: #{mlp_softmax.1} parent=1 // pred_check_branch
      %165 = sbr.rel (0) target = $region37
    $region36: #{mlp_softmax.1} parent=1 // pred_region
      %167 = dma.done [#allocation3], 128
    $region37: #{mlp_softmax.1} parent=1 // pred_fallthru
      _
    %168 = vsyncpa [#allocation3], 1

</llo_original>
